<compile_context>
chip_gen: v6e
topology: v6e:2x2x1
jax: 0.10.0
libtpu: 0.0.40
codegen_flags: <defaults>
</compile_context>

<pallas_src>
import jax
import jax.numpy as jnp
from jax.experimental import pallas as pl
from jax.experimental.pallas import tpu as pltpu

TAU = 2.0
THRESHOLD = 1.0
LANE = 128  # lane-dense width for the (padded) class dimension


def lif_net_kernel(x_ref, w1_ref, b1_ref, w2_ref, b2_ref, out_ref):
    # x streamed as f32; VPU cast to bf16 in VMEM (hidden under the x DMA).
    x_bf = x_ref[...].astype(jnp.bfloat16)
    # fc1: (tile_b, D_in)bf16 @ (D_in, H)bf16 -> f32 accumulate, + f32 bias
    h = jnp.dot(x_bf, w1_ref[...],
                preferred_element_type=jnp.float32) + b1_ref[...]
    # LIF with v0 = 0: v = h/tau ; spike = (v >= thr)  <=>  h >= tau*thr
    spikes = (h >= (TAU * THRESHOLD)).astype(jnp.bfloat16)
    # fc2: (tile_b, H)bf16 @ (H, C_pad)bf16 -> f32, + f32 bias (lane-dense store)
    out_ref[...] = jnp.dot(spikes, w2_ref[...],
                           preferred_element_type=jnp.float32) + b2_ref[...]


def _round_up(x, m):
    return ((x + m - 1) // m) * m


def prepare_lif_params(w1, b1, w2, b2):
    """One-time (model-init) conversion of torch-layout params to kernel layout.

    w1: (hidden, input), b1: (hidden,), w2: (classes, hidden), b2: (classes,)
    Returns kernel-ready dict: W1^T / W2^T in bf16, biases as (1, out) f32,
    class dim padded to a multiple of 128 lanes.
    """
    hidden, d_in = w1.shape
    classes = w2.shape[0]
    c_pad = _round_up(classes, LANE)

    w1_t = jnp.asarray(w1, jnp.float32).T.astype(jnp.bfloat16)          # (D_in, H)
    b1_r = jnp.asarray(b1, jnp.float32).reshape(1, hidden)              # (1, H)
    w2_t = jnp.zeros((hidden, c_pad), jnp.bfloat16)                     # (H, C_pad)
    w2_t = w2_t.at[:, :classes].set(
        jnp.asarray(w2, jnp.float32).T.astype(jnp.bfloat16))
    b2_r = jnp.zeros((1, c_pad), jnp.float32)                           # (1, C_pad)
    b2_r = b2_r.at[:, :classes].set(jnp.asarray(b2, jnp.float32).reshape(1, classes))

    return dict(w1_t=w1_t, b1_r=b1_r, w2_t=w2_t, b2_r=b2_r,
                d_in=d_in, hidden=hidden, classes=classes, c_pad=c_pad)


def _tpu_generation():
    try:
        kind = jax.devices()[0].device_kind.lower()
    except Exception:
        return "other"
    if "v5 lite" in kind or "v5e" in kind or "v5lite" in kind:
        return "v5e"
    if "v6" in kind:
        return "v6e"
    if "v7" in kind or "7x" in kind:
        return "v7x"
    return "other"


def _choose_tile(B, gen):
    # Per-generation cap sized for f32 x streaming (4 B/elem).
    caps = {"v5e": 256, "v6e": 1024, "v7x": 1024, "other": 512}
    cap = caps[gen]
    if B <= cap:
        if gen == "v7x" and B >= 64:
            # Split medium batches into 2 tiles so both TensorCores are used.
            tile_b = min(_round_up((B + 1) // 2, 16), B)
        else:
            tile_b = B  # single tile: per-grid-step overhead would dominate
    else:
        tile_b = cap
    return tile_b


def lif_network_forward(x_nchw, params):
    """x_nchw: (B, C, H, W) float32. Returns (B, num_classes) float32 logits."""
    B = x_nchw.shape[0]
    d_in = params["d_in"]
    hidden = params["hidden"]
    classes = params["classes"]
    c_pad = params["c_pad"]

    # Free bitcast-reshape of contiguous NCHW; NO dtype cast here (kernel casts).
    x = x_nchw.reshape(B, -1)
    assert x.shape[1] == d_in

    gen = _tpu_generation()
    tile_b = _choose_tile(B, gen)
    grid = (pl.cdiv(B, tile_b),)  # partial final block handled by Pallas

    # Scoped-VMEM budget from actual double-buffered working set (+ headroom).
    x_bytes = 2 * tile_b * d_in * 4
    w_bytes = 2 * (d_in * hidden * 2 + hidden * c_pad * 2 + (hidden + c_pad) * 4)
    o_bytes = 2 * tile_b * c_pad * 4
    vmem_limit = int((x_bytes + w_bytes + o_bytes) * 1.25) + (4 << 20)
    vmem_limit = max(vmem_limit, 16 << 20)
    vmem_limit = min(vmem_limit, 56 << 20)  # stay under v7x's 64 MiB physical

    out = pl.pallas_call(
        lif_net_kernel,
        out_shape=jax.ShapeDtypeStruct((B, c_pad), jnp.float32),
        grid_spec=pltpu.PrefetchScalarGridSpec(
            num_scalar_prefetch=0,
            grid=grid,
            in_specs=[
                pl.BlockSpec((tile_b, d_in), lambda i: (i, 0)),   # x tiles stream (f32)
                pl.BlockSpec((d_in, hidden), lambda i: (0, 0)),   # W1 resident
                pl.BlockSpec((1, hidden), lambda i: (0, 0)),      # b1 resident
                pl.BlockSpec((hidden, c_pad), lambda i: (0, 0)),  # W2 resident
                pl.BlockSpec((1, c_pad), lambda i: (0, 0)),       # b2 resident
            ],
            out_specs=pl.BlockSpec((tile_b, c_pad), lambda i: (i, 0)),
        ),
        compiler_params=pltpu.CompilerParams(
            dimension_semantics=("parallel",),
            vmem_limit_bytes=vmem_limit),
    )(x, params["w1_t"], params["b1_r"], params["w2_t"], params["b2_r"])

    return out[:, :classes]


if __name__ == "__main__":
    # Small shapes consistent with the module's forward (flatten -> fc1 -> LIF -> fc2).
    B, C, H, W = 4, 3, 16, 16
    input_size = C * H * W          # 768
    hidden_size = 128
    num_classes = 10

    key = jax.random.PRNGKey(0)
    kx, k1, kb1, k2, kb2 = jax.random.split(key, 5)

    x = jax.random.normal(kx, (B, C, H, W), dtype=jnp.float32)
    # Deterministic synthetic parameters (torch-Linear shapes: (out, in)).
    w1 = 0.02 * jax.random.normal(k1, (hidden_size, input_size), dtype=jnp.float32)
    b1 = 0.1 * jax.random.normal(kb1, (hidden_size,), dtype=jnp.float32)
    w2 = 0.05 * jax.random.normal(k2, (num_classes, hidden_size), dtype=jnp.float32)
    b2 = 0.1 * jax.random.normal(kb2, (num_classes,), dtype=jnp.float32)

    params = prepare_lif_params(w1, b1, w2, b2)      # one-time init cost
    out = lif_network_forward(x, params)
    out = jax.block_until_ready(out)

    # Pure-JAX reference with matching bf16 matmul inputs / f32 accumulation.
    x2d = x.reshape(B, -1).astype(jnp.bfloat16)
    w1_bf = w1.astype(jnp.bfloat16)
    w2_bf = w2.astype(jnp.bfloat16)
    h_ref = jnp.dot(x2d, w1_bf.T, preferred_element_type=jnp.float32) + b1
    s_ref = (h_ref >= TAU * THRESHOLD).astype(jnp.bfloat16)
    ref = jnp.dot(s_ref, w2_bf.T, preferred_element_type=jnp.float32) + b2

    assert out.shape == (B, num_classes)
    assert jnp.allclose(out, ref, atol=2e-3, rtol=2e-3)

    print("KERNEL_OK")
</pallas_src>

<mosaic_0001>
module attributes {stable_mosaic.version = 11 : i64} {
  func.func @lif_net_kernel(%arg0: i32, %arg1: memref<4x768xf32, #tpu.memory_space<vmem>>, %arg2: memref<768x128xbf16, #tpu.memory_space<vmem>>, %arg3: memref<1x128xf32, #tpu.memory_space<vmem>>, %arg4: memref<128x128xbf16, #tpu.memory_space<vmem>>, %arg5: memref<1x128xf32, #tpu.memory_space<vmem>>, %arg6: memref<4x128xf32, #tpu.memory_space<vmem>>) attributes {dimension_semantics = [#tpu.dimension_semantics<parallel>], iteration_bounds = array<i64: 1>, scalar_prefetch = 0 : i64, scratch_operands = 0 : i64, tpu.core_type = #tpu.core_type<tc>, window_params = [{transform_indices = @transform_0, window_bounds = array<i64: 4, 768>}, {pipeline_mode = #tpu.pipeline_mode<synchronous>, transform_indices = @transform_1, window_bounds = array<i64: 768, 128>}, {pipeline_mode = #tpu.pipeline_mode<synchronous>, transform_indices = @transform_2, window_bounds = array<i64: 1, 128>}, {pipeline_mode = #tpu.pipeline_mode<synchronous>, transform_indices = @transform_3, window_bounds = array<i64: 128, 128>}, {pipeline_mode = #tpu.pipeline_mode<synchronous>, transform_indices = @transform_4, window_bounds = array<i64: 1, 128>}, {transform_indices = @transform_5, window_bounds = array<i64: 4, 128>}]} {
    %c0 = arith.constant 0 : index
    %c0_0 = arith.constant 0 : index
    %0 = vector.load %arg1[%c0, %c0_0] : memref<4x768xf32, #tpu.memory_space<vmem>>, vector<4x768xf32>
    %1 = arith.truncf %0 : vector<4x768xf32> to vector<4x768xbf16>
    %c0_1 = arith.constant 0 : index
    %c0_2 = arith.constant 0 : index
    %2 = vector.load %arg2[%c0_1, %c0_2] : memref<768x128xbf16, #tpu.memory_space<vmem>>, vector<768x128xbf16>
    %cst = arith.constant dense<0.000000e+00> : vector<4x128xf32>
    %3 = tpu.matmul %1, %2, %cst {dimension_numbers = #tpu.dot_dimension_numbers<[1], [0], [0], [1], [0, 0, 1, 1], [], []>} : vector<4x768xbf16>, vector<768x128xbf16>, vector<4x128xf32> -> vector<4x128xf32>
    %c0_3 = arith.constant 0 : index
    %c0_4 = arith.constant 0 : index
    %4 = vector.load %arg3[%c0_3, %c0_4] : memref<1x128xf32, #tpu.memory_space<vmem>>, vector<1x128xf32>
    %5 = vector.broadcast %4 : vector<1x128xf32> to vector<4x128xf32>
    %6 = arith.addf %3, %5 : vector<4x128xf32>
    %cst_5 = arith.constant 2.000000e+00 : f32
    %7 = vector.broadcast %cst_5 : f32 to vector<4x128xf32>
    %8 = arith.cmpf oge, %6, %7 : vector<4x128xf32>
    %9 = arith.extui %8 : vector<4x128xi1> to vector<4x128xi32>
    %10 = arith.sitofp %9 : vector<4x128xi32> to vector<4x128xf32>
    %11 = arith.truncf %10 : vector<4x128xf32> to vector<4x128xbf16>
    %c0_6 = arith.constant 0 : index
    %c0_7 = arith.constant 0 : index
    %12 = vector.load %arg4[%c0_6, %c0_7] : memref<128x128xbf16, #tpu.memory_space<vmem>>, vector<128x128xbf16>
    %cst_8 = arith.constant dense<0.000000e+00> : vector<4x128xf32>
    %13 = tpu.matmul %11, %12, %cst_8 {dimension_numbers = #tpu.dot_dimension_numbers<[1], [0], [0], [1], [0, 0, 1, 1], [], []>} : vector<4x128xbf16>, vector<128x128xbf16>, vector<4x128xf32> -> vector<4x128xf32>
    %c0_9 = arith.constant 0 : index
    %c0_10 = arith.constant 0 : index
    %14 = vector.load %arg5[%c0_9, %c0_10] : memref<1x128xf32, #tpu.memory_space<vmem>>, vector<1x128xf32>
    %15 = vector.broadcast %14 : vector<1x128xf32> to vector<4x128xf32>
    %16 = arith.addf %13, %15 : vector<4x128xf32>
    %c0_11 = arith.constant 0 : index
    %c0_12 = arith.constant 0 : index
    %17 = vector.load %arg6[%c0_11, %c0_12] : memref<4x128xf32, #tpu.memory_space<vmem>>, vector<4x128xf32>
    tpu.vector_store %arg6[%c0_11, %c0_12], %16 {strides = array<i32>} : memref<4x128xf32, #tpu.memory_space<vmem>>, vector<4x128xf32>,
    return
  }
  func.func @transform_0(%arg0: i32) -> (i32, i32) {
    %c0_i32 = arith.constant 0 : i32
    %c0_i32_0 = arith.constant 0 : i32
    return %arg0, %c0_i32 : i32, i32
  }
  func.func @transform_1(%arg0: i32) -> (i32, i32) {
    %c0_i32 = arith.constant 0 : i32
    %c0_i32_0 = arith.constant 0 : i32
    %c0_i32_1 = arith.constant 0 : i32
    return %c0_i32, %c0_i32_0 : i32, i32
  }
  func.func @transform_2(%arg0: i32) -> (i32, i32) {
    %c0_i32 = arith.constant 0 : i32
    %c0_i32_0 = arith.constant 0 : i32
    %c0_i32_1 = arith.constant 0 : i32
    return %c0_i32, %c0_i32_0 : i32, i32
  }
  func.func @transform_3(%arg0: i32) -> (i32, i32) {
    %c0_i32 = arith.constant 0 : i32
    %c0_i32_0 = arith.constant 0 : i32
    %c0_i32_1 = arith.constant 0 : i32
    return %c0_i32, %c0_i32_0 : i32, i32
  }
  func.func @transform_4(%arg0: i32) -> (i32, i32) {
    %c0_i32 = arith.constant 0 : i32
    %c0_i32_0 = arith.constant 0 : i32
    %c0_i32_1 = arith.constant 0 : i32
    return %c0_i32, %c0_i32_0 : i32, i32
  }
  func.func @transform_5(%arg0: i32) -> (i32, i32) {
    %c0_i32 = arith.constant 0 : i32
    %c0_i32_0 = arith.constant 0 : i32
    return %arg0, %c0_i32 : i32, i32
  }
}

</mosaic_0001>

<llo_original>
// kernel: tpu_custom_call.1
$region0: #{tpu_custom_call.1}
  #allocation0 [shape = 'u32[]', space=smem, size = 0x4, offset = 0x4, fixed_abs, tag = 'smem constant byte address 0x4 - core index']
  #allocation1 [shape = 'u32[144,128]{1,0:T(1,128)}', space=vmem, size = 0x12000, scoped, tag = 'internal scratch']
  %s0 = inlined_call_operand.hbm [shape: f32[4,768], index: 0, kind: input, shape index: {}]
  %s1 = inlined_call_operand.hbm [shape: bf16[768,128], index: 1, kind: input, shape index: {}]
  %s2 = inlined_call_operand.vmem [shape: f32[1,128], index: 2, kind: input, shape index: {}]
  %s3 = inlined_call_operand.hbm [shape: bf16[128,128], index: 3, kind: input, shape index: {}]
  %s4 = inlined_call_operand.vmem [shape: f32[1,128], index: 4, kind: input, shape index: {}]
  %s5 = inlined_call_operand.hbm [shape: f32[4,128], index: 5, kind: output, shape index: {}]
  %s6 = sld [smem:[#allocation0]]
  $region42: #{tpu_custom_call.1} parent=0
    _
  %s8 = ssub.s32 1, %s6
  %s9 = scalar_select 0, %s8, %s6
  $region1: #{tpu_custom_call.1} parent=0
    #allocation2 [shape = 'u8[12288]{0}', space=vmem, size = 0x3000, scoped, tag = 'input window, operand 0, single buffered']
    #allocation3 [shape = 's32[1]{0}', space=sflag, size = 0x4, scoped, tag = 'scoped memory for tpu_custom_call.1']
    #allocation4 [shape = 's32[1]{0}', space=sflag, size = 0x4, scoped, tag = 'scoped memory for tpu_custom_call.1']
    #allocation5 [shape = 'u8[196608]{0}', space=vmem, size = 0x30000, scoped, tag = 'input window, operand 1, single buffered']
    #allocation6 [shape = 's32[1]{0}', space=sflag, size = 0x4, scoped, tag = 'scoped memory for tpu_custom_call.1']
    #allocation7 [shape = 'u8[32768]{0}', space=vmem, size = 0x8000, scoped, tag = 'input window, operand 3, single buffered']
    #allocation8 [shape = 'u8[2048]{0}', space=vmem, size = 0x800, scoped, tag = 'output window, operand 0, single buffered']
    %10 = vsyncpa [#allocation3], 0
    %11 = vsyncpa [#allocation6], 0
    %12 = vsyncpa [#allocation4], 0
    // Predicated region
    $region2: #{tpu_custom_call.1} parent=1 // pred_check
      _
    $region3: #{tpu_custom_call.1} parent=1 // pred_check_branch
      %14 = sbr.rel (0) target = $region5
    $region4: #{tpu_custom_call.1} parent=1 // pred_region
      %s16 = ssub.s32 384, 384
      %17 = vsyncadd [#allocation3], %s16
      %s19 = sshll.u32 [#allocation2], 4
      %s20 = int_to_ptr.vmem [resolvable:$true] %s19
      %22 = dma.hbm_to_vmem [thread:$0]  %s0, 384, %s20, [#allocation3]
    $region5: #{tpu_custom_call.1} parent=1 // pred_fallthru
      _
    // Predicated region
    $region6: #{tpu_custom_call.1} parent=1 // pred_check
      _
    $region7: #{tpu_custom_call.1} parent=1 // pred_check_branch
      %24 = sbr.rel (0) target = $region9
    $region8: #{tpu_custom_call.1} parent=1 // pred_region
      %s26 = ssub.s32 6144, 6144
      %27 = vsyncadd [#allocation6], %s26
      %s28 = sshll.u32 [#allocation5], 4
      %s29 = int_to_ptr.vmem [resolvable:$true] %s28
      %34 = dma.hbm_to_vmem [thread:$0]  %s1, 6144, %s29, [#allocation6], 64, 64, 4
    $region9: #{tpu_custom_call.1} parent=1 // pred_fallthru
      _
    // Predicated region
    $region10: #{tpu_custom_call.1} parent=1 // pred_check
      _
    $region11: #{tpu_custom_call.1} parent=1 // pred_check_branch
      %36 = sbr.rel (0) target = $region13
    $region12: #{tpu_custom_call.1} parent=1 // pred_region
      _
    $region13: #{tpu_custom_call.1} parent=1 // pred_fallthru
      _
    // Predicated region
    $region14: #{tpu_custom_call.1} parent=1 // pred_check
      _
    $region15: #{tpu_custom_call.1} parent=1 // pred_check_branch
      %38 = sbr.rel (0) target = $region17
    $region16: #{tpu_custom_call.1} parent=1 // pred_region
      %s40 = ssub.s32 1024, 1024
      %41 = vsyncadd [#allocation6], %s40
      %s42 = sshll.u32 [#allocation7], 4
      %s43 = int_to_ptr.vmem [resolvable:$true] %s42
      %48 = dma.hbm_to_vmem [thread:$0]  %s3, 1024, %s43, [#allocation6], 64, 64, 4
    $region17: #{tpu_custom_call.1} parent=1 // pred_fallthru
      _
    // Predicated region
    $region18: #{tpu_custom_call.1} parent=1 // pred_check
      _
    $region19: #{tpu_custom_call.1} parent=1 // pred_check_branch
      %50 = sbr.rel (0) target = $region21
    $region20: #{tpu_custom_call.1} parent=1 // pred_region
      _
    $region21: #{tpu_custom_call.1} parent=1 // pred_fallthru
      _
    // Predicated region
    $region22: #{tpu_custom_call.1} parent=1 // pred_check
      _
    $region23: #{tpu_custom_call.1} parent=1 // pred_check_branch
      %52 = sbr.rel (0) target = $region25
    $region24: #{tpu_custom_call.1} parent=1 // pred_region
      %53 = dma.done [#allocation3], 384
    $region25: #{tpu_custom_call.1} parent=1 // pred_fallthru
      _
    // Predicated region
    $region26: #{tpu_custom_call.1} parent=1 // pred_check
      _
    $region27: #{tpu_custom_call.1} parent=1 // pred_check_branch
      %55 = sbr.rel (0) target = $region29
    $region28: #{tpu_custom_call.1} parent=1 // pred_region
      %56 = dma.done [#allocation6], 6144
    $region29: #{tpu_custom_call.1} parent=1 // pred_fallthru
      _
    // Predicated region
    $region30: #{tpu_custom_call.1} parent=1 // pred_check
      _
    $region31: #{tpu_custom_call.1} parent=1 // pred_check_branch
      %58 = sbr.rel (0) target = $region33
    $region32: #{tpu_custom_call.1} parent=1 // pred_region
      %59 = dma.done [#allocation6], 1024
    $region33: #{tpu_custom_call.1} parent=1 // pred_fallthru
      _
    %v61 = vld [vmem:[#allocation2] sm:$0xff]
    %v62 = vld [vmem:[#allocation2 + $0x8] sm:$0xff]
    %v63 = vld [vmem:[#allocation2 + $0x10] sm:$0xff]
    %v67 = vcombine.high %v61, %v61
    %v68 = vcombine.high %v62, %v62
    %v69 = vcombine.high %v63, %v63
    %v73 = vpack.c.bf16 %v61, %v61
    %v74 = vpack.c.bf16 %v67, %v67
    %v75 = vpack.c.bf16 %v62, %v62
    %v76 = vpack.c.bf16 %v68, %v68
    %v77 = vpack.c.bf16 %v63, %v63
    %v78 = vpack.c.bf16 %v69, %v69
    %v79 = vld [vmem:[#allocation5] sm:$0xf]
    %v80 = vld [vmem:[#allocation5 + $0x4] sm:$0xf]
    %v81 = vld [vmem:[#allocation5 + $0x8] sm:$0xf]
    %v82 = vld [vmem:[#allocation5 + $0xc] sm:$0xf]
    %v83 = vld [vmem:[#allocation5 + $0x10] sm:$0xf]
    %v84 = vld [vmem:[#allocation5 + $0x14] sm:$0xf]
    %v85 = vld [vmem:[#allocation5 + $0x18] sm:$0xf]
    %v86 = vld [vmem:[#allocation5 + $0x1c] sm:$0xf]
    %v87 = vld [vmem:[#allocation5 + $0x20] sm:$0xf]
    %v88 = vld [vmem:[#allocation5 + $0x24] sm:$0xf]
    %v89 = vld [vmem:[#allocation5 + $0x28] sm:$0xf]
    %v90 = vld [vmem:[#allocation5 + $0x2c] sm:$0xf]
    %v91 = vld [vmem:[#allocation5 + $0x30] sm:$0xf]
    %v92 = vld [vmem:[#allocation5 + $0x34] sm:$0xf]
    %v93 = vld [vmem:[#allocation5 + $0x38] sm:$0xf]
    %v94 = vld [vmem:[#allocation5 + $0x3c] sm:$0xf]
    %v95 = vld [vmem:[#allocation5 + $0x40] sm:$0xf]
    %v96 = vld [vmem:[#allocation5 + $0x44] sm:$0xf]
    %v97 = vld [vmem:[#allocation5 + $0x48] sm:$0xf]
    %v98 = vld [vmem:[#allocation5 + $0x4c] sm:$0xf]
    %v99 = vld [vmem:[#allocation5 + $0x50] sm:$0xf]
    %v100 = vld [vmem:[#allocation5 + $0x54] sm:$0xf]
    %v101 = vld [vmem:[#allocation5 + $0x58] sm:$0xf]
    %v102 = vld [vmem:[#allocation5 + $0x5c] sm:$0xf]
    %v103 = vld [vmem:[#allocation5 + $0x60] sm:$0xf]
    %v104 = vld [vmem:[#allocation5 + $0x64] sm:$0xf]
    %v105 = vld [vmem:[#allocation5 + $0x68] sm:$0xf]
    %v106 = vld [vmem:[#allocation5 + $0x6c] sm:$0xf]
    %v107 = vld [vmem:[#allocation5 + $0x70] sm:$0xf]
    %v108 = vld [vmem:[#allocation5 + $0x74] sm:$0xf]
    %v109 = vld [vmem:[#allocation5 + $0x78] sm:$0xf]
    %v110 = vld [vmem:[#allocation5 + $0x7c] sm:$0xf]
    %v111 = vld [vmem:[#allocation5 + $0x80] sm:$0xf]
    %v112 = vld [vmem:[#allocation5 + $0x84] sm:$0xf]
    %v113 = vld [vmem:[#allocation5 + $0x88] sm:$0xf]
    %v114 = vld [vmem:[#allocation5 + $0x8c] sm:$0xf]
    %v115 = vld [vmem:[#allocation5 + $0x90] sm:$0xf]
    %v116 = vld [vmem:[#allocation5 + $0x94] sm:$0xf]
    %v117 = vld [vmem:[#allocation5 + $0x98] sm:$0xf]
    %v118 = vld [vmem:[#allocation5 + $0x9c] sm:$0xf]
    %v119 = vld [vmem:[#allocation5 + $0xa0] sm:$0xf]
    %v120 = vld [vmem:[#allocation5 + $0xa4] sm:$0xf]
    %v121 = vld [vmem:[#allocation5 + $0xa8] sm:$0xf]
    %v122 = vld [vmem:[#allocation5 + $0xac] sm:$0xf]
    %v123 = vld [vmem:[#allocation5 + $0xb0] sm:$0xf]
    %v124 = vld [vmem:[#allocation5 + $0xb4] sm:$0xf]
    %v125 = vld [vmem:[#allocation5 + $0xb8] sm:$0xf]
    %v126 = vld [vmem:[#allocation5 + $0xbc] sm:$0xf]
    %v127 = vld [vmem:[#allocation5 + $0xc0] sm:$0xf]
    %v128 = vld [vmem:[#allocation5 + $0xc4] sm:$0xf]
    %v129 = vld [vmem:[#allocation5 + $0xc8] sm:$0xf]
    %v130 = vld [vmem:[#allocation5 + $0xcc] sm:$0xf]
    %v131 = vld [vmem:[#allocation5 + $0xd0] sm:$0xf]
    %v132 = vld [vmem:[#allocation5 + $0xd4] sm:$0xf]
    %v133 = vld [vmem:[#allocation5 + $0xd8] sm:$0xf]
    %v134 = vld [vmem:[#allocation5 + $0xdc] sm:$0xf]
    %v135 = vld [vmem:[#allocation5 + $0xe0] sm:$0xf]
    %v136 = vld [vmem:[#allocation5 + $0xe4] sm:$0xf]
    %v137 = vld [vmem:[#allocation5 + $0xe8] sm:$0xf]
    %v138 = vld [vmem:[#allocation5 + $0xec] sm:$0xf]
    %v139 = vld [vmem:[#allocation5 + $0xf0] sm:$0xf]
    %v140 = vld [vmem:[#allocation5 + $0xf4] sm:$0xf]
    %v141 = vld [vmem:[#allocation5 + $0xf8] sm:$0xf]
    %v142 = vld [vmem:[#allocation5 + $0xfc] sm:$0xf]
    %v143 = vld [vmem:[#allocation5 + $0x100] sm:$0xf]
    %v144 = vld [vmem:[#allocation5 + $0x104] sm:$0xf]
    %v145 = vld [vmem:[#allocation5 + $0x108] sm:$0xf]
    %v146 = vld [vmem:[#allocation5 + $0x10c] sm:$0xf]
    %v147 = vld [vmem:[#allocation5 + $0x110] sm:$0xf]
    %v148 = vld [vmem:[#allocation5 + $0x114] sm:$0xf]
    %v149 = vld [vmem:[#allocation5 + $0x118] sm:$0xf]
    %v150 = vld [vmem:[#allocation5 + $0x11c] sm:$0xf]
    %v151 = vld [vmem:[#allocation5 + $0x120] sm:$0xf]
    %v152 = vld [vmem:[#allocation5 + $0x124] sm:$0xf]
    %v153 = vld [vmem:[#allocation5 + $0x128] sm:$0xf]
    %v154 = vld [vmem:[#allocation5 + $0x12c] sm:$0xf]
    %v155 = vld [vmem:[#allocation5 + $0x130] sm:$0xf]
    %v156 = vld [vmem:[#allocation5 + $0x134] sm:$0xf]
    %v157 = vld [vmem:[#allocation5 + $0x138] sm:$0xf]
    %v158 = vld [vmem:[#allocation5 + $0x13c] sm:$0xf]
    %v159 = vld [vmem:[#allocation5 + $0x140] sm:$0xf]
    %v160 = vld [vmem:[#allocation5 + $0x144] sm:$0xf]
    %v161 = vld [vmem:[#allocation5 + $0x148] sm:$0xf]
    %v162 = vld [vmem:[#allocation5 + $0x14c] sm:$0xf]
    %v163 = vld [vmem:[#allocation5 + $0x150] sm:$0xf]
    %v164 = vld [vmem:[#allocation5 + $0x154] sm:$0xf]
    %v165 = vld [vmem:[#allocation5 + $0x158] sm:$0xf]
    %v166 = vld [vmem:[#allocation5 + $0x15c] sm:$0xf]
    %v167 = vld [vmem:[#allocation5 + $0x160] sm:$0xf]
    %v168 = vld [vmem:[#allocation5 + $0x164] sm:$0xf]
    %v169 = vld [vmem:[#allocation5 + $0x168] sm:$0xf]
    %v170 = vld [vmem:[#allocation5 + $0x16c] sm:$0xf]
    %v171 = vld [vmem:[#allocation5 + $0x170] sm:$0xf]
    %v172 = vld [vmem:[#allocation5 + $0x174] sm:$0xf]
    %v173 = vld [vmem:[#allocation5 + $0x178] sm:$0xf]
    %v174 = vld [vmem:[#allocation5 + $0x17c] sm:$0xf]
    %v175 = vld [vmem:[%s2] sm:$0x1]
    %v177 = vlaneseq
    %v178 = vshrl.u32 %v177, 7
    %v179 = vsub.s32 0, %v178
    %v180 = vrot.slane %v175, %v179
    %v278 = vunpack.c.l.b16 %v79
    %v279 = vunpack.c.l.b16 %v80
    %v280 = vunpack.c.l.b16 %v81
    %v281 = vunpack.c.l.b16 %v82
    %v282 = vunpack.c.l.b16 %v83
    %v283 = vunpack.c.l.b16 %v84
    %v284 = vunpack.c.l.b16 %v85
    %v285 = vunpack.c.l.b16 %v86
    %v286 = vunpack.c.l.b16 %v87
    %v287 = vunpack.c.l.b16 %v88
    %v288 = vunpack.c.l.b16 %v89
    %v289 = vunpack.c.l.b16 %v90
    %v290 = vunpack.c.l.b16 %v91
    %v291 = vunpack.c.l.b16 %v92
    %v292 = vunpack.c.l.b16 %v93
    %v293 = vunpack.c.l.b16 %v94
    %v294 = vunpack.c.l.b16 %v95
    %v295 = vunpack.c.l.b16 %v96
    %v296 = vunpack.c.l.b16 %v97
    %v297 = vunpack.c.l.b16 %v98
    %v298 = vunpack.c.l.b16 %v99
    %v299 = vunpack.c.l.b16 %v100
    %v300 = vunpack.c.l.b16 %v101
    %v301 = vunpack.c.l.b16 %v102
    %v302 = vunpack.c.l.b16 %v103
    %v303 = vunpack.c.l.b16 %v104
    %v304 = vunpack.c.l.b16 %v105
    %v305 = vunpack.c.l.b16 %v106
    %v306 = vunpack.c.l.b16 %v107
    %v307 = vunpack.c.l.b16 %v108
    %v308 = vunpack.c.l.b16 %v109
    %v309 = vunpack.c.l.b16 %v110
    %v310 = vunpack.c.l.b16 %v111
    %v311 = vunpack.c.l.b16 %v112
    %v312 = vunpack.c.l.b16 %v113
    %v313 = vunpack.c.l.b16 %v114
    %v314 = vunpack.c.l.b16 %v115
    %v315 = vunpack.c.l.b16 %v116
    %v316 = vunpack.c.l.b16 %v117
    %v317 = vunpack.c.l.b16 %v118
    %v318 = vunpack.c.l.b16 %v119
    %v319 = vunpack.c.l.b16 %v120
    %v320 = vunpack.c.l.b16 %v121
    %v321 = vunpack.c.l.b16 %v122
    %v322 = vunpack.c.l.b16 %v123
    %v323 = vunpack.c.l.b16 %v124
    %v324 = vunpack.c.l.b16 %v125
    %v325 = vunpack.c.l.b16 %v126
    %v326 = vunpack.c.l.b16 %v127
    %v327 = vunpack.c.l.b16 %v128
    %v328 = vunpack.c.l.b16 %v129
    %v329 = vunpack.c.l.b16 %v130
    %v330 = vunpack.c.l.b16 %v131
    %v331 = vunpack.c.l.b16 %v132
    %v332 = vunpack.c.l.b16 %v133
    %v333 = vunpack.c.l.b16 %v134
    %v334 = vunpack.c.l.b16 %v135
    %v335 = vunpack.c.l.b16 %v136
    %v336 = vunpack.c.l.b16 %v137
    %v337 = vunpack.c.l.b16 %v138
    %v338 = vunpack.c.l.b16 %v139
    %v339 = vunpack.c.l.b16 %v140
    %v340 = vunpack.c.l.b16 %v141
    %v341 = vunpack.c.l.b16 %v142
    %v342 = vunpack.c.l.b16 %v143
    %v343 = vunpack.c.l.b16 %v144
    %v344 = vunpack.c.l.b16 %v145
    %v345 = vunpack.c.l.b16 %v146
    %v346 = vunpack.c.l.b16 %v147
    %v347 = vunpack.c.l.b16 %v148
    %v348 = vunpack.c.l.b16 %v149
    %v349 = vunpack.c.l.b16 %v150
    %v350 = vunpack.c.l.b16 %v151
    %v351 = vunpack.c.l.b16 %v152
    %v352 = vunpack.c.l.b16 %v153
    %v353 = vunpack.c.l.b16 %v154
    %v354 = vunpack.c.l.b16 %v155
    %v355 = vunpack.c.l.b16 %v156
    %v356 = vunpack.c.l.b16 %v157
    %v357 = vunpack.c.l.b16 %v158
    %v358 = vunpack.c.l.b16 %v159
    %v359 = vunpack.c.l.b16 %v160
    %v360 = vunpack.c.l.b16 %v161
    %v361 = vunpack.c.l.b16 %v162
    %v362 = vunpack.c.l.b16 %v163
    %v363 = vunpack.c.l.b16 %v164
    %v364 = vunpack.c.l.b16 %v165
    %v365 = vunpack.c.l.b16 %v166
    %v366 = vunpack.c.l.b16 %v167
    %v367 = vunpack.c.l.b16 %v168
    %v368 = vunpack.c.l.b16 %v169
    %v369 = vunpack.c.l.b16 %v170
    %v370 = vunpack.c.l.b16 %v171
    %v371 = vunpack.c.l.b16 %v172
    %v372 = vunpack.c.l.b16 %v173
    %v373 = vunpack.c.l.b16 %v174
    %v374 = vpack.c.b16 %v279, %v278
    %v375 = vpack.c.b16 %v281, %v280
    %v376 = vpack.c.b16 %v283, %v282
    %v377 = vpack.c.b16 %v285, %v284
    %v378 = vpack.c.b16 %v287, %v286
    %v379 = vpack.c.b16 %v289, %v288
    %v380 = vpack.c.b16 %v291, %v290
    %v381 = vpack.c.b16 %v293, %v292
    %v382 = vpack.c.b16 %v295, %v294
    %v383 = vpack.c.b16 %v297, %v296
    %v384 = vpack.c.b16 %v299, %v298
    %v385 = vpack.c.b16 %v301, %v300
    %v386 = vpack.c.b16 %v303, %v302
    %v387 = vpack.c.b16 %v305, %v304
    %v388 = vpack.c.b16 %v307, %v306
    %v389 = vpack.c.b16 %v309, %v308
    %v390 = vpack.c.b16 %v311, %v310
    %v391 = vpack.c.b16 %v313, %v312
    %v392 = vpack.c.b16 %v315, %v314
    %v393 = vpack.c.b16 %v317, %v316
    %v394 = vpack.c.b16 %v319, %v318
    %v395 = vpack.c.b16 %v321, %v320
    %v396 = vpack.c.b16 %v323, %v322
    %v397 = vpack.c.b16 %v325, %v324
    %v398 = vpack.c.b16 %v327, %v326
    %v399 = vpack.c.b16 %v329, %v328
    %v400 = vpack.c.b16 %v331, %v330
    %v401 = vpack.c.b16 %v333, %v332
    %v402 = vpack.c.b16 %v335, %v334
    %v403 = vpack.c.b16 %v337, %v336
    %v404 = vpack.c.b16 %v339, %v338
    %v405 = vpack.c.b16 %v341, %v340
    %v406 = vpack.c.b16 %v343, %v342
    %v407 = vpack.c.b16 %v345, %v344
    %v408 = vpack.c.b16 %v347, %v346
    %v409 = vpack.c.b16 %v349, %v348
    %v410 = vpack.c.b16 %v351, %v350
    %v411 = vpack.c.b16 %v353, %v352
    %v412 = vpack.c.b16 %v355, %v354
    %v413 = vpack.c.b16 %v357, %v356
    %v414 = vpack.c.b16 %v359, %v358
    %v415 = vpack.c.b16 %v361, %v360
    %v416 = vpack.c.b16 %v363, %v362
    %v417 = vpack.c.b16 %v365, %v364
    %v418 = vpack.c.b16 %v367, %v366
    %v419 = vpack.c.b16 %v369, %v368
    %v420 = vpack.c.b16 %v371, %v370
    %v421 = vpack.c.b16 %v373, %v372
    %470 = vmatprep.subr.bf16.mxu0 0
    %471 = vmatpush1.bf16.msra.mxu0 %v381
    %472 = vmatprep.subr.bf16.mxu0 0
    %473 = vmatpush1.bf16.msra.mxu0 %v380
    %474 = vmatprep.subr.bf16.mxu0 0
    %475 = vmatpush1.bf16.msra.mxu0 %v379
    %476 = vmatprep.subr.bf16.mxu0 0
    %477 = vmatpush1.bf16.msra.mxu0 %v378
    %478 = vmatprep.subr.bf16.mxu0 0
    %479 = vmatpush1.bf16.msra.mxu0 %v377
    %480 = vmatprep.subr.bf16.mxu0 0
    %481 = vmatpush1.bf16.msra.mxu0 %v376
    %482 = vmatprep.subr.bf16.mxu0 0
    %483 = vmatpush1.bf16.msra.mxu0 %v375
    %484 = vmatprep.subr.bf16.mxu0 0
    %485 = vmatpush1.bf16.msra.mxu0 %v374
    %486 = vmatprep.subr.bf16.mxu0 0
    %487 = vmatpush2.bf16.msra.mxu0 %v389
    %488 = vmatprep.subr.bf16.mxu0 0
    %489 = vmatpush2.bf16.msra.mxu0 %v388
    %490 = vmatprep.subr.bf16.mxu0 0
    %491 = vmatpush2.bf16.msra.mxu0 %v387
    %492 = vmatprep.subr.bf16.mxu0 0
    %493 = vmatpush2.bf16.msra.mxu0 %v386
    %494 = vmatprep.subr.bf16.mxu0 0
    %495 = vmatpush2.bf16.msra.mxu0 %v385
    %496 = vmatprep.subr.bf16.mxu0 0
    %497 = vmatpush2.bf16.msra.mxu0 %v384
    %498 = vmatprep.subr.bf16.mxu0 0
    %499 = vmatpush2.bf16.msra.mxu0 %v383
    %500 = vmatprep.subr.bf16.mxu0 0
    %501 = vmatpush2.bf16.msra.mxu0 %v382
    %502 = vmatprep.mubr.bf16.mxu0 %v74
    %503 = vmatmul.mubr.bf16.gmra.mxu0 %v73
    %v504 = vpop.f32.mrf.mxu0
    %v505 = vadd.f32 %v180, %v504
    %v506 = vpop.f32.mrf.mxu0
    %v507 = vpop.f32.mrf.mxu0
    %v508 = vpop.f32.mrf.mxu0
    %509 = vdwg.mxu0
    %510 = vmatprep.subr.bf16.mxu0 0
    %511 = vmatpush1.bf16.msra.mxu0 %v397
    %512 = vmatprep.subr.bf16.mxu0 0
    %513 = vmatpush1.bf16.msra.mxu0 %v396
    %514 = vmatprep.subr.bf16.mxu0 0
    %515 = vmatpush1.bf16.msra.mxu0 %v395
    %516 = vmatprep.subr.bf16.mxu0 0
    %517 = vmatpush1.bf16.msra.mxu0 %v394
    %518 = vmatprep.subr.bf16.mxu0 0
    %519 = vmatpush1.bf16.msra.mxu0 %v393
    %520 = vmatprep.subr.bf16.mxu0 0
    %521 = vmatpush1.bf16.msra.mxu0 %v392
    %522 = vmatprep.subr.bf16.mxu0 0
    %523 = vmatpush1.bf16.msra.mxu0 %v391
    %524 = vmatprep.subr.bf16.mxu0 0
    %525 = vmatpush1.bf16.msra.mxu0 %v390
    %526 = vmatprep.subr.bf16.mxu0 0
    %527 = vmatpush2.bf16.msra.mxu0 %v405
    %528 = vmatprep.subr.bf16.mxu0 0
    %529 = vmatpush2.bf16.msra.mxu0 %v404
    %530 = vmatprep.subr.bf16.mxu0 0
    %531 = vmatpush2.bf16.msra.mxu0 %v403
    %532 = vmatprep.subr.bf16.mxu0 0
    %533 = vmatpush2.bf16.msra.mxu0 %v402
    %534 = vmatprep.subr.bf16.mxu0 0
    %535 = vmatpush2.bf16.msra.mxu0 %v401
    %536 = vmatprep.subr.bf16.mxu0 0
    %537 = vmatpush2.bf16.msra.mxu0 %v400
    %538 = vmatprep.subr.bf16.mxu0 0
    %539 = vmatpush2.bf16.msra.mxu0 %v399
    %540 = vmatprep.subr.bf16.mxu0 0
    %541 = vmatpush2.bf16.msra.mxu0 %v398
    %542 = vmatprep.mubr.bf16.mxu0 %v76
    %543 = vmatmul.mubr.bf16.gmra.mxu0 %v75
    %v544 = vpop.f32.mrf.mxu0
    %v545 = vadd.f32 %v505, %v544
    %v546 = vpop.f32.mrf.mxu0
    %v547 = vpop.f32.mrf.mxu0
    %v548 = vpop.f32.mrf.mxu0
    %549 = vdwg.mxu0
    %550 = vmatprep.subr.bf16.mxu0 0
    %551 = vmatpush1.bf16.msra.mxu0 %v413
    %552 = vmatprep.subr.bf16.mxu0 0
    %553 = vmatpush1.bf16.msra.mxu0 %v412
    %554 = vmatprep.subr.bf16.mxu0 0
    %555 = vmatpush1.bf16.msra.mxu0 %v411
    %556 = vmatprep.subr.bf16.mxu0 0
    %557 = vmatpush1.bf16.msra.mxu0 %v410
    %558 = vmatprep.subr.bf16.mxu0 0
    %559 = vmatpush1.bf16.msra.mxu0 %v409
    %560 = vmatprep.subr.bf16.mxu0 0
    %561 = vmatpush1.bf16.msra.mxu0 %v408
    %562 = vmatprep.subr.bf16.mxu0 0
    %563 = vmatpush1.bf16.msra.mxu0 %v407
    %564 = vmatprep.subr.bf16.mxu0 0
    %565 = vmatpush1.bf16.msra.mxu0 %v406
    %566 = vmatprep.subr.bf16.mxu0 0
    %567 = vmatpush2.bf16.msra.mxu0 %v421
    %568 = vmatprep.subr.bf16.mxu0 0
    %569 = vmatpush2.bf16.msra.mxu0 %v420
    %570 = vmatprep.subr.bf16.mxu0 0
    %571 = vmatpush2.bf16.msra.mxu0 %v419
    %572 = vmatprep.subr.bf16.mxu0 0
    %573 = vmatpush2.bf16.msra.mxu0 %v418
    %574 = vmatprep.subr.bf16.mxu0 0
    %575 = vmatpush2.bf16.msra.mxu0 %v417
    %576 = vmatprep.subr.bf16.mxu0 0
    %577 = vmatpush2.bf16.msra.mxu0 %v416
    %578 = vmatprep.subr.bf16.mxu0 0
    %579 = vmatpush2.bf16.msra.mxu0 %v415
    %580 = vmatprep.subr.bf16.mxu0 0
    %581 = vmatpush2.bf16.msra.mxu0 %v414
    %582 = vmatprep.mubr.bf16.mxu0 %v78
    %583 = vmatmul.mubr.bf16.gmra.mxu0 %v77
    %v584 = vpop.f32.mrf.mxu0
    %v585 = vadd.f32 %v545, %v584
    %v586 = vpop.f32.mrf.mxu0
    %v587 = vpop.f32.mrf.mxu0
    %v588 = vpop.f32.mrf.mxu0
    %589 = vdwg.mxu0
    %vm590 = vcmp.ge.f32.partialorder %v585, 2.0
    %v591 = vsel %vm590, 1, 0
    %v592 = vcvt.s32.f32 %v591
    %v593 = vpack.c.bf16 %v592, %v592
    %v594 = vld [vmem:[#allocation7] sm:$0xf]
    %v595 = vld [vmem:[#allocation7 + $0x4] sm:$0xf]
    %v596 = vld [vmem:[#allocation7 + $0x8] sm:$0xf]
    %v597 = vld [vmem:[#allocation7 + $0xc] sm:$0xf]
    %v598 = vld [vmem:[#allocation7 + $0x10] sm:$0xf]
    %v599 = vld [vmem:[#allocation7 + $0x14] sm:$0xf]
    %v600 = vld [vmem:[#allocation7 + $0x18] sm:$0xf]
    %v601 = vld [vmem:[#allocation7 + $0x1c] sm:$0xf]
    %v602 = vld [vmem:[#allocation7 + $0x20] sm:$0xf]
    %v603 = vld [vmem:[#allocation7 + $0x24] sm:$0xf]
    %v604 = vld [vmem:[#allocation7 + $0x28] sm:$0xf]
    %v605 = vld [vmem:[#allocation7 + $0x2c] sm:$0xf]
    %v606 = vld [vmem:[#allocation7 + $0x30] sm:$0xf]
    %v607 = vld [vmem:[#allocation7 + $0x34] sm:$0xf]
    %v608 = vld [vmem:[#allocation7 + $0x38] sm:$0xf]
    %v609 = vld [vmem:[#allocation7 + $0x3c] sm:$0xf]
    %v610 = vld [vmem:[%s4] sm:$0x1]
    %v612 = vlaneseq
    %v613 = vshrl.u32 %v612, 7
    %v614 = vsub.s32 0, %v613
    %v615 = vrot.slane %v610, %v614
    %v633 = vunpack.c.l.b16 %v594
    %v634 = vunpack.c.l.b16 %v595
    %v635 = vunpack.c.l.b16 %v596
    %v636 = vunpack.c.l.b16 %v597
    %v637 = vunpack.c.l.b16 %v598
    %v638 = vunpack.c.l.b16 %v599
    %v639 = vunpack.c.l.b16 %v600
    %v640 = vunpack.c.l.b16 %v601
    %v641 = vunpack.c.l.b16 %v602
    %v642 = vunpack.c.l.b16 %v603
    %v643 = vunpack.c.l.b16 %v604
    %v644 = vunpack.c.l.b16 %v605
    %v645 = vunpack.c.l.b16 %v606
    %v646 = vunpack.c.l.b16 %v607
    %v647 = vunpack.c.l.b16 %v608
    %v648 = vunpack.c.l.b16 %v609
    %v649 = vpack.c.b16 %v634, %v633
    %v650 = vpack.c.b16 %v636, %v635
    %v651 = vpack.c.b16 %v638, %v637
    %v652 = vpack.c.b16 %v640, %v639
    %v653 = vpack.c.b16 %v642, %v641
    %v654 = vpack.c.b16 %v644, %v643
    %v655 = vpack.c.b16 %v646, %v645
    %v656 = vpack.c.b16 %v648, %v647
    %665 = vmatprep.subr.bf16.mxu0 0
    %666 = vmatpush1.bf16.msra.mxu0 %v656
    %667 = vmatprep.subr.bf16.mxu0 0
    %668 = vmatpush1.bf16.msra.mxu0 %v655
    %669 = vmatprep.subr.bf16.mxu0 0
    %670 = vmatpush1.bf16.msra.mxu0 %v654
    %671 = vmatprep.subr.bf16.mxu0 0
    %672 = vmatpush1.bf16.msra.mxu0 %v653
    %673 = vmatprep.subr.bf16.mxu0 0
    %674 = vmatpush1.bf16.msra.mxu0 %v652
    %675 = vmatprep.subr.bf16.mxu0 0
    %676 = vmatpush1.bf16.msra.mxu0 %v651
    %677 = vmatprep.subr.bf16.mxu0 0
    %678 = vmatpush1.bf16.msra.mxu0 %v650
    %679 = vmatprep.subr.bf16.mxu0 0
    %680 = vmatpush1.bf16.msra.mxu0 %v649
    %681 = vmatprep.subr.bf16.mxu0 0
    %682 = vmatpush2.bf16.msra.mxu0 0
    %683 = vmatprep.subr.bf16.mxu0 0
    %684 = vmatpush2.bf16.msra.mxu0 0
    %685 = vmatprep.subr.bf16.mxu0 0
    %686 = vmatpush2.bf16.msra.mxu0 0
    %687 = vmatprep.subr.bf16.mxu0 0
    %688 = vmatpush2.bf16.msra.mxu0 0
    %689 = vmatprep.subr.bf16.mxu0 0
    %690 = vmatpush2.bf16.msra.mxu0 0
    %691 = vmatprep.subr.bf16.mxu0 0
    %692 = vmatpush2.bf16.msra.mxu0 0
    %693 = vmatprep.subr.bf16.mxu0 0
    %694 = vmatpush2.bf16.msra.mxu0 0
    %695 = vmatprep.subr.bf16.mxu0 0
    %696 = vmatpush2.bf16.msra.mxu0 0
    %697 = vmatprep.mubr.bf16.mxu0 0
    %698 = vmatmul.mubr.bf16.gmra.mxu0 %v593
    %v699 = vpop.f32.mrf.mxu0
    %v700 = vadd.f32 %v615, %v699
    %v701 = vpop.f32.mrf.mxu0
    %v702 = vpop.f32.mrf.mxu0
    %v703 = vpop.f32.mrf.mxu0
    %704 = vdwg.mxu0
    %705 = vst [vmem:[#allocation8] sm:$0xf] %v700
    // Predicated region
    $region34: #{tpu_custom_call.1} parent=1 // pred_check
      _
    $region35: #{tpu_custom_call.1} parent=1 // pred_check_branch
      %707 = sbr.rel (0) target = $region37
    $region36: #{tpu_custom_call.1} parent=1 // pred_region
      %s709 = ssub.s32 64, 64
      %710 = vsyncadd [#allocation4], %s709
      %s712 = sshll.u32 [#allocation8], 4
      %s713 = int_to_ptr.vmem [resolvable:$true] %s712
      %715 = dma.vmem_to_hbm [thread:$0]  %s713, 64, %s5, [#allocation4]
    $region37: #{tpu_custom_call.1} parent=1 // pred_fallthru
      _
    // Predicated region
    $region38: #{tpu_custom_call.1} parent=1 // pred_check
      _
    $region39: #{tpu_custom_call.1} parent=1 // pred_check_branch
      %717 = sbr.rel (0) target = $region41
    $region40: #{tpu_custom_call.1} parent=1 // pred_region
      %718 = dma.done [#allocation4], 64
    $region41: #{tpu_custom_call.1} parent=1 // pred_fallthru
      _
    %719 = vsyncpa [#allocation3], 1
    %720 = vsyncpa [#allocation6], 1
    %721 = vsyncpa [#allocation4], 1

</llo_original>
